<compile_context>
chip_gen: v7x
topology: tpu7x:2x2x1
jax: 0.10.0
libtpu: 0.0.40
codegen_flags: <defaults>
</compile_context>

<pallas_src>
import numpy as np
import jax
import jax.numpy as jnp
from jax import lax
from jax.experimental import pallas as pl
from jax.experimental.pallas import tpu as pltpu

HIDDEN1 = 256
HIDDEN2 = 128


def _cdiv(a, b):
    return (a + b - 1) // b


def _round_up(n, m):
    return ((n + m - 1) // m) * m


def critic_kernel(x_ref, w1_ref, b1_ref, w2_ref, b2_ref, w3_ref, b3_ref, o_ref):
    # Layer 1: single MXU matmul over the fused (state || action) input.
    h1 = jnp.dot(x_ref[...], w1_ref[...],
                 preferred_element_type=jnp.float32) + b1_ref[...]
    h1 = jnp.maximum(h1, 0.0)
    # Layer 2.
    h2 = jnp.dot(h1.astype(w2_ref.dtype), w2_ref[...],
                 preferred_element_type=jnp.float32) + b2_ref[...]
    h2 = jnp.maximum(h2, 0.0)
    # Layer 3 (128 -> 1), emitted lane-dense: contract w3 (1, 128) with h2's
    # feature dim -> (1, tm) row, so stores are unmasked lane-dense vsts.
    q = lax.dot_general(w3_ref[...], h2.astype(w3_ref.dtype),
                        dimension_numbers=(((1,), (1,)), ((), ())),
                        preferred_element_type=jnp.float32) + b3_ref[...]
    # Output block is (1, 8, tm); broadcast the row over the 8 sublanes so the
    # whole block is written (output is tiny, so the 8x is negligible).
    tm = o_ref.shape[-1]
    o_ref[0] = jnp.broadcast_to(q, (8, tm)).astype(o_ref.dtype)


def critic_forward(full_state, full_action, params, *, block_batch=256,
                   use_bf16=False):
    """full_state: [B, state_size*num_agents], full_action: [B, action_size*num_agents]."""
    w1, b1, w2, b2, w3, b3 = params
    in_dim = w1.shape[0]

    B = full_state.shape[0]
    xs = full_state.reshape(B, -1)
    xa = full_action.reshape(B, -1)
    x = jnp.concatenate([xs, xa], axis=1).astype(jnp.float32)
    assert x.shape[1] == in_dim, (x.shape, in_dim)

    # Balanced batch tiling: tiles are (nearly) equal sized, rounded up to the
    # 8-row sublane granule, so padding waste is < 8 rows per tile.
    num_tiles = max(1, _cdiv(B, block_batch))
    if B >= 256:
        # Keep at least 2 grid steps so both v7x TensorCores get work
        # (no-op on single-TC v5e/v6e).
        num_tiles = max(num_tiles, 2)
    tm = _round_up(_cdiv(B, num_tiles), 8)
    Bp = num_tiles * tm
    if Bp != B:
        x = jnp.pad(x, ((0, Bp - B), (0, 0)))

    mm_dtype = jnp.bfloat16 if use_bf16 else jnp.float32
    x = x.astype(mm_dtype)
    w1c = w1.astype(mm_dtype)
    w2c = w2.astype(mm_dtype)
    w3c = w3.astype(mm_dtype)

    # Weights / biases: same block every grid step -> VMEM-resident.
    def resident(shape):
        return pl.BlockSpec(shape, lambda i: (0, 0))

    itemsize = jnp.dtype(mm_dtype).itemsize
    flops = int(2 * Bp * (in_dim * HIDDEN1 + HIDDEN1 * HIDDEN2 + HIDDEN2))
    bytes_accessed = int(
        x.size * itemsize                                   # input tiles
        + num_tiles * 8 * tm * 4                            # output slab
        + (w1c.size + w2c.size + w3c.size) * itemsize       # weights (once)
        + (b1.size + b2.size + b3.size) * 4)                # biases

    out = pl.pallas_call(
        critic_kernel,
        out_shape=jax.ShapeDtypeStruct((num_tiles, 8, tm), jnp.float32),
        grid=(num_tiles,),
        in_specs=[
            pl.BlockSpec((tm, in_dim), lambda i: (i, 0)),   # x tile
            resident((in_dim, HIDDEN1)),                    # W1
            resident((1, HIDDEN1)),                         # b1
            resident((HIDDEN1, HIDDEN2)),                   # W2
            resident((1, HIDDEN2)),                         # b2
            resident((1, HIDDEN2)),                         # w3 (lane-dense)
            resident((1, 1)),                               # b3
        ],
        out_specs=pl.BlockSpec((1, 8, tm), lambda i: (i, 0, 0)),
        compiler_params=pltpu.CompilerParams(
            dimension_semantics=("parallel",)),
        cost_estimate=pl.CostEstimate(
            flops=flops, transcendentals=0, bytes_accessed=bytes_accessed),
    )(x, w1c, b1, w2c, b2, w3c, b3)

    # (num_tiles, 8, tm) slab -> (B, 1) column.
    q = out[:, 0, :].reshape(Bp)[:B].reshape(B, 1)
    return q


def init_critic_params(state_size, action_size, num_agents, seed):
    """Deterministic init mirroring Critic.reset_parameters().

    NOTE: hidden_init() in the reference uses weight.size()[0] == out_features
    for nn.Linear, so lim = sqrt(1 / out_features); reproduced exactly.
    W1 is stored as [in, out] so the kernel computes x @ W; W3 is stored
    lane-dense as (1, 128).
    """
    full_state = state_size * num_agents
    full_action = action_size * num_agents
    in_dim = full_state + full_action

    key = jax.random.PRNGKey(seed)
    k1, k2, k3, kb1, kb2, kb3 = jax.random.split(key, 6)

    lim1 = float(np.sqrt(1.0 / HIDDEN1))
    lim2 = float(np.sqrt(1.0 / HIDDEN2))
    lim3 = 0.003

    w1 = jax.random.uniform(k1, (in_dim, HIDDEN1), jnp.float32, -lim1, lim1)
    w2 = jax.random.uniform(k2, (HIDDEN1, HIDDEN2), jnp.float32, -lim2, lim2)
    w3 = jax.random.uniform(k3, (1, HIDDEN2), jnp.float32, -lim3, lim3)
    # Biases: PyTorch Linear default uniform(-1/sqrt(fan_in), 1/sqrt(fan_in)).
    b1 = jax.random.uniform(kb1, (1, HIDDEN1), jnp.float32,
                            -1.0 / np.sqrt(in_dim), 1.0 / np.sqrt(in_dim))
    b2 = jax.random.uniform(kb2, (1, HIDDEN2), jnp.float32,
                            -1.0 / np.sqrt(HIDDEN1), 1.0 / np.sqrt(HIDDEN1))
    b3 = jax.random.uniform(kb3, (1, 1), jnp.float32,
                            -1.0 / np.sqrt(HIDDEN2), 1.0 / np.sqrt(HIDDEN2))
    return (w1, b1, w2, b2, w3, b3)


def critic_ref(full_state, full_action, params):
    """Pure-JAX reference (same math as the PyTorch forward)."""
    w1, b1, w2, b2, w3, b3 = params
    xs = full_state.reshape(full_state.shape[0], -1)
    xa = full_action.reshape(full_action.shape[0], -1)
    x = jnp.concatenate([xs, xa], axis=1)
    h1 = jnp.maximum(x @ w1 + b1, 0.0)
    h2 = jnp.maximum(h1 @ w2 + b2, 0.0)
    return h2 @ w3.T + b3


if __name__ == "__main__":
    state_size, action_size, num_agents, seed = 24, 2, 2, 0
    params = init_critic_params(state_size, action_size, num_agents, seed)

    key = jax.random.PRNGKey(0)

    # Small batch (typical DDPG inference shape).
    batch = 8
    ks, ka = jax.random.split(key)
    full_state = jax.random.normal(ks, (batch, state_size * num_agents), jnp.float32)
    full_action = jax.random.normal(ka, (batch, action_size * num_agents), jnp.float32)

    q = jax.block_until_ready(critic_forward(full_state, full_action, params))
    q_ref = critic_ref(full_state, full_action, params)
    np.testing.assert_allclose(np.asarray(q), np.asarray(q_ref), rtol=1e-5, atol=1e-5)
    assert q.shape == (batch, 1)

    # Larger, non-tile-aligned batch: exercises balanced tiling, padding and
    # the multi-step (>=2 tiles) grid path.
    batch2 = 300
    ks2, ka2 = jax.random.split(jax.random.PRNGKey(1))
    fs2 = jax.random.normal(ks2, (batch2, state_size * num_agents), jnp.float32)
    fa2 = jax.random.normal(ka2, (batch2, action_size * num_agents), jnp.float32)
    q2 = jax.block_until_ready(critic_forward(fs2, fa2, params, block_batch=128))
    q2_ref = critic_ref(fs2, fa2, params)
    np.testing.assert_allclose(np.asarray(q2), np.asarray(q2_ref), rtol=1e-5, atol=1e-5)
    assert q2.shape == (batch2, 1)

    print("KERNEL_OK")
</pallas_src>

<mosaic_0001>
module attributes {stable_mosaic.version = 11 : i64} {
  func.func @critic_kernel(%arg0: i32, %arg1: memref<8x52xf32, #tpu.memory_space<vmem>>, %arg2: memref<52x256xf32, #tpu.memory_space<vmem>>, %arg3: memref<1x256xf32, #tpu.memory_space<vmem>>, %arg4: memref<256x128xf32, #tpu.memory_space<vmem>>, %arg5: memref<1x128xf32, #tpu.memory_space<vmem>>, %arg6: memref<1x128xf32, #tpu.memory_space<vmem>>, %arg7: memref<1x1xf32, #tpu.memory_space<vmem>>, %arg8: memref<1x8x8xf32, #tpu.memory_space<vmem>>) attributes {dimension_semantics = [#tpu.dimension_semantics<parallel>], iteration_bounds = array<i64: 1>, scalar_prefetch = 0 : i64, scratch_operands = 0 : i64, tpu.core_type = #tpu.core_type<tc>, window_params = [{transform_indices = @transform_0, window_bounds = array<i64: 8, 52>}, {pipeline_mode = #tpu.pipeline_mode<synchronous>, transform_indices = @transform_1, window_bounds = array<i64: 52, 256>}, {pipeline_mode = #tpu.pipeline_mode<synchronous>, transform_indices = @transform_2, window_bounds = array<i64: 1, 256>}, {pipeline_mode = #tpu.pipeline_mode<synchronous>, transform_indices = @transform_3, window_bounds = array<i64: 256, 128>}, {pipeline_mode = #tpu.pipeline_mode<synchronous>, transform_indices = @transform_4, window_bounds = array<i64: 1, 128>}, {pipeline_mode = #tpu.pipeline_mode<synchronous>, transform_indices = @transform_5, window_bounds = array<i64: 1, 128>}, {pipeline_mode = #tpu.pipeline_mode<synchronous>, transform_indices = @transform_6, window_bounds = array<i64: 1, 1>}, {transform_indices = @transform_7, window_bounds = array<i64: 1, 8, 8>}]} {
    %c0 = arith.constant 0 : index
    %c0_0 = arith.constant 0 : index
    %0 = vector.load %arg1[%c0, %c0_0] : memref<8x52xf32, #tpu.memory_space<vmem>>, vector<8x52xf32>
    %c0_1 = arith.constant 0 : index
    %c0_2 = arith.constant 0 : index
    %1 = vector.load %arg2[%c0_1, %c0_2] : memref<52x256xf32, #tpu.memory_space<vmem>>, vector<52x256xf32>
    %cst = arith.constant dense<0.000000e+00> : vector<8x256xf32>
    %2 = tpu.matmul %0, %1, %cst {dimension_numbers = #tpu.dot_dimension_numbers<[1], [0], [0], [1], [0, 0, 1, 1], [], []>} : vector<8x52xf32>, vector<52x256xf32>, vector<8x256xf32> -> vector<8x256xf32>
    %c0_3 = arith.constant 0 : index
    %c0_4 = arith.constant 0 : index
    %3 = vector.load %arg3[%c0_3, %c0_4] : memref<1x256xf32, #tpu.memory_space<vmem>>, vector<1x256xf32>
    %4 = vector.broadcast %3 : vector<1x256xf32> to vector<8x256xf32>
    %5 = arith.addf %2, %4 : vector<8x256xf32>
    %cst_5 = arith.constant 0.000000e+00 : f32
    %6 = vector.broadcast %cst_5 : f32 to vector<8x256xf32>
    %7 = arith.maximumf %5, %6 : vector<8x256xf32>
    %c0_6 = arith.constant 0 : index
    %c0_7 = arith.constant 0 : index
    %8 = vector.load %arg4[%c0_6, %c0_7] : memref<256x128xf32, #tpu.memory_space<vmem>>, vector<256x128xf32>
    %cst_8 = arith.constant dense<0.000000e+00> : vector<8x128xf32>
    %9 = tpu.matmul %7, %8, %cst_8 {dimension_numbers = #tpu.dot_dimension_numbers<[1], [0], [0], [1], [0, 0, 1, 1], [], []>} : vector<8x256xf32>, vector<256x128xf32>, vector<8x128xf32> -> vector<8x128xf32>
    %c0_9 = arith.constant 0 : index
    %c0_10 = arith.constant 0 : index
    %10 = vector.load %arg5[%c0_9, %c0_10] : memref<1x128xf32, #tpu.memory_space<vmem>>, vector<1x128xf32>
    %11 = vector.broadcast %10 : vector<1x128xf32> to vector<8x128xf32>
    %12 = arith.addf %9, %11 : vector<8x128xf32>
    %cst_11 = arith.constant 0.000000e+00 : f32
    %13 = vector.broadcast %cst_11 : f32 to vector<8x128xf32>
    %14 = arith.maximumf %12, %13 : vector<8x128xf32>
    %c0_12 = arith.constant 0 : index
    %c0_13 = arith.constant 0 : index
    %15 = vector.load %arg6[%c0_12, %c0_13] : memref<1x128xf32, #tpu.memory_space<vmem>>, vector<1x128xf32>
    %cst_14 = arith.constant dense<0.000000e+00> : vector<1x8xf32>
    %16 = tpu.matmul %15, %14, %cst_14 {dimension_numbers = #tpu.dot_dimension_numbers<[1], [1], [0], [0], [0, 0, 1, 0], [], []>} : vector<1x128xf32>, vector<8x128xf32>, vector<1x8xf32> -> vector<1x8xf32>
    %c0_15 = arith.constant 0 : index
    %c0_16 = arith.constant 0 : index
    %17 = vector.load %arg7[%c0_15, %c0_16] : memref<1x1xf32, #tpu.memory_space<vmem>>, vector<1x1xf32>
    %18 = vector.broadcast %17 : vector<1x1xf32> to vector<1x8xf32>
    %19 = arith.addf %16, %18 : vector<1x8xf32>
    %20 = vector.shape_cast %19 : vector<1x8xf32> to vector<1x8xf32>
    %21 = vector.broadcast %20 : vector<1x8xf32> to vector<8x8xf32>
    %c0_17 = arith.constant 0 : index
    %c0_18 = arith.constant 0 : index
    %c0_19 = arith.constant 0 : index
    %22 = vector.load %arg8[%c0_17, %c0_18, %c0_19] : memref<1x8x8xf32, #tpu.memory_space<vmem>>, vector<1x8x8xf32>
    %23 = vector.shape_cast %22 : vector<1x8x8xf32> to vector<8x8xf32>
    %24 = vector.shape_cast %21 : vector<8x8xf32> to vector<1x8x8xf32>
    tpu.vector_store %arg8[%c0_17, %c0_18, %c0_19], %24 {strides = array<i32>} : memref<1x8x8xf32, #tpu.memory_space<vmem>>, vector<1x8x8xf32>,
    return
  }
  func.func @transform_0(%arg0: i32) -> (i32, i32) {
    %c0_i32 = arith.constant 0 : i32
    %c0_i32_0 = arith.constant 0 : i32
    return %arg0, %c0_i32 : i32, i32
  }
  func.func @transform_1(%arg0: i32) -> (i32, i32) {
    %c0_i32 = arith.constant 0 : i32
    %c0_i32_0 = arith.constant 0 : i32
    %c0_i32_1 = arith.constant 0 : i32
    return %c0_i32, %c0_i32_0 : i32, i32
  }
  func.func @transform_2(%arg0: i32) -> (i32, i32) {
    %c0_i32 = arith.constant 0 : i32
    %c0_i32_0 = arith.constant 0 : i32
    %c0_i32_1 = arith.constant 0 : i32
    return %c0_i32, %c0_i32_0 : i32, i32
  }
  func.func @transform_3(%arg0: i32) -> (i32, i32) {
    %c0_i32 = arith.constant 0 : i32
    %c0_i32_0 = arith.constant 0 : i32
    %c0_i32_1 = arith.constant 0 : i32
    return %c0_i32, %c0_i32_0 : i32, i32
  }
  func.func @transform_4(%arg0: i32) -> (i32, i32) {
    %c0_i32 = arith.constant 0 : i32
    %c0_i32_0 = arith.constant 0 : i32
    %c0_i32_1 = arith.constant 0 : i32
    return %c0_i32, %c0_i32_0 : i32, i32
  }
  func.func @transform_5(%arg0: i32) -> (i32, i32) {
    %c0_i32 = arith.constant 0 : i32
    %c0_i32_0 = arith.constant 0 : i32
    %c0_i32_1 = arith.constant 0 : i32
    return %c0_i32, %c0_i32_0 : i32, i32
  }
  func.func @transform_6(%arg0: i32) -> (i32, i32) {
    %c0_i32 = arith.constant 0 : i32
    %c0_i32_0 = arith.constant 0 : i32
    %c0_i32_1 = arith.constant 0 : i32
    return %c0_i32, %c0_i32_0 : i32, i32
  }
  func.func @transform_7(%arg0: i32) -> (i32, i32, i32) {
    %c0_i32 = arith.constant 0 : i32
    %c0_i32_0 = arith.constant 0 : i32
    %c0_i32_1 = arith.constant 0 : i32
    return %arg0, %c0_i32, %c0_i32_0 : i32, i32, i32
  }
}

</mosaic_0001>

<llo_original>
// kernel: tpu_custom_call.1
$region0: #{tpu_custom_call.1}
  #allocation0 [shape = 'u32[]', space=smem, size = 0x4, offset = 0x4, fixed_abs, tag = 'smem constant byte address 0x4 - core index']
  #allocation1 [shape = 'u32[144,128]{1,0:T(1,128)}', space=vmem, size = 0x12000, scoped, tag = 'internal scratch']
  #allocation2 [shape = 'f32[1,1]{1,0:T(1,128)S(1)}', space=vmem, size = 0x200, scoped, tag = 'scoped memory for tpu_custom_call.1']
  %s0 = inlined_call_operand.hbm [shape: f32[8,52], index: 0, kind: input, shape index: {}]
  %s1 = inlined_call_operand.hbm [shape: f32[52,256], index: 1, kind: input, shape index: {}]
  %s2 = inlined_call_operand.vmem [shape: f32[1,256], index: 2, kind: input, shape index: {}]
  %s3 = inlined_call_operand.hbm [shape: f32[256,128], index: 3, kind: input, shape index: {}]
  %s4 = inlined_call_operand.vmem [shape: f32[1,128], index: 4, kind: input, shape index: {}]
  %s5 = inlined_call_operand.vmem [shape: f32[1,128], index: 5, kind: input, shape index: {}]
  %s6 = inlined_call_operand.<no memory space> [shape: f32[1,1], index: 6, kind: input, shape index: {}]
  %s7 = inlined_call_operand.hbm [shape: f32[1,8,8], index: 7, kind: output, shape index: {}]
  %s8 = sld [smem:[#allocation0]]
  $region50: #{tpu_custom_call.1} parent=0
    _
  %s10 = ssub.s32 1, %s8
  %s11 = scalar_select 0, %s10, %s8
  %v12 = vstv %s6
  %13 = vst [vmem:[#allocation2] sm:$0x1] %v12
  $region1: #{tpu_custom_call.1} parent=0
    #allocation3 [shape = 'u8[4096]{0}', space=vmem, size = 0x1000, scoped, tag = 'input window, operand 0, single buffered']
    #allocation4 [shape = 's32[1]{0}', space=sflag, size = 0x4, scoped, tag = 'scoped memory for tpu_custom_call.1']
    #allocation5 [shape = 's32[1]{0}', space=sflag, size = 0x4, scoped, tag = 'scoped memory for tpu_custom_call.1']
    #allocation6 [shape = 'u8[57344]{0}', space=vmem, size = 0xe000, scoped, tag = 'input window, operand 1, single buffered']
    #allocation7 [shape = 's32[1]{0}', space=sflag, size = 0x4, scoped, tag = 'scoped memory for tpu_custom_call.1']
    #allocation8 [shape = 'u8[131072]{0}', space=vmem, size = 0x20000, scoped, tag = 'input window, operand 3, single buffered']
    #allocation9 [shape = 'u8[4096]{0}', space=vmem, size = 0x1000, scoped, tag = 'output window, operand 0, single buffered']
    %14 = vsyncpa [#allocation4], 0
    %15 = vsyncpa [#allocation7], 0
    %16 = vsyncpa [#allocation5], 0
    // Predicated region
    $region2: #{tpu_custom_call.1} parent=1 // pred_check
      _
    $region3: #{tpu_custom_call.1} parent=1 // pred_check_branch
      %18 = sbr.rel (0) target = $region5
    $region4: #{tpu_custom_call.1} parent=1 // pred_region
      %s20 = ssub.s32 128, 128
      %21 = vsyncadd [#allocation4], %s20
      %s23 = sshll.u32 [#allocation3], 4
      %s24 = int_to_ptr.vmem [resolvable:$true] %s23
      %26 = dma.hbm_to_vmem [thread:$0]  %s0, 128, %s24, [#allocation4]
    $region5: #{tpu_custom_call.1} parent=1 // pred_fallthru
      _
    // Predicated region
    $region6: #{tpu_custom_call.1} parent=1 // pred_check
      _
    $region7: #{tpu_custom_call.1} parent=1 // pred_check_branch
      %28 = sbr.rel (0) target = $region9
    $region8: #{tpu_custom_call.1} parent=1 // pred_region
      %s30 = ssub.s32 1792, 1792
      %31 = vsyncadd [#allocation7], %s30
      %s32 = sshll.u32 [#allocation6], 4
      %s33 = int_to_ptr.vmem [resolvable:$true] %s32
      %38 = dma.hbm_to_vmem [thread:$0]  %s1, 1792, %s33, [#allocation7], 256, 256, 16
    $region9: #{tpu_custom_call.1} parent=1 // pred_fallthru
      _
    // Predicated region
    $region10: #{tpu_custom_call.1} parent=1 // pred_check
      _
    $region11: #{tpu_custom_call.1} parent=1 // pred_check_branch
      %40 = sbr.rel (0) target = $region13
    $region12: #{tpu_custom_call.1} parent=1 // pred_region
      _
    $region13: #{tpu_custom_call.1} parent=1 // pred_fallthru
      _
    // Predicated region
    $region14: #{tpu_custom_call.1} parent=1 // pred_check
      _
    $region15: #{tpu_custom_call.1} parent=1 // pred_check_branch
      %42 = sbr.rel (0) target = $region17
    $region16: #{tpu_custom_call.1} parent=1 // pred_region
      %s44 = ssub.s32 4096, 4096
      %45 = vsyncadd [#allocation7], %s44
      %s46 = sshll.u32 [#allocation8], 4
      %s47 = int_to_ptr.vmem [resolvable:$true] %s46
      %52 = dma.hbm_to_vmem [thread:$0]  %s3, 4096, %s47, [#allocation7], 128, 128, 8
    $region17: #{tpu_custom_call.1} parent=1 // pred_fallthru
      _
    // Predicated region
    $region18: #{tpu_custom_call.1} parent=1 // pred_check
      _
    $region19: #{tpu_custom_call.1} parent=1 // pred_check_branch
      %54 = sbr.rel (0) target = $region21
    $region20: #{tpu_custom_call.1} parent=1 // pred_region
      _
    $region21: #{tpu_custom_call.1} parent=1 // pred_fallthru
      _
    // Predicated region
    $region22: #{tpu_custom_call.1} parent=1 // pred_check
      _
    $region23: #{tpu_custom_call.1} parent=1 // pred_check_branch
      %56 = sbr.rel (0) target = $region25
    $region24: #{tpu_custom_call.1} parent=1 // pred_region
      _
    $region25: #{tpu_custom_call.1} parent=1 // pred_fallthru
      _
    // Predicated region
    $region26: #{tpu_custom_call.1} parent=1 // pred_check
      _
    $region27: #{tpu_custom_call.1} parent=1 // pred_check_branch
      %58 = sbr.rel (0) target = $region29
    $region28: #{tpu_custom_call.1} parent=1 // pred_region
      _
    $region29: #{tpu_custom_call.1} parent=1 // pred_fallthru
      _
    // Predicated region
    $region30: #{tpu_custom_call.1} parent=1 // pred_check
      _
    $region31: #{tpu_custom_call.1} parent=1 // pred_check_branch
      %60 = sbr.rel (0) target = $region33
    $region32: #{tpu_custom_call.1} parent=1 // pred_region
      %61 = dma.done [#allocation4], 128
    $region33: #{tpu_custom_call.1} parent=1 // pred_fallthru
      _
    // Predicated region
    $region34: #{tpu_custom_call.1} parent=1 // pred_check
      _
    $region35: #{tpu_custom_call.1} parent=1 // pred_check_branch
      %63 = sbr.rel (0) target = $region37
    $region36: #{tpu_custom_call.1} parent=1 // pred_region
      %64 = dma.done [#allocation7], 1792
    $region37: #{tpu_custom_call.1} parent=1 // pred_fallthru
      _
    // Predicated region
    $region38: #{tpu_custom_call.1} parent=1 // pred_check
      _
    $region39: #{tpu_custom_call.1} parent=1 // pred_check_branch
      %66 = sbr.rel (0) target = $region41
    $region40: #{tpu_custom_call.1} parent=1 // pred_region
      %67 = dma.done [#allocation7], 4096
    $region41: #{tpu_custom_call.1} parent=1 // pred_fallthru
      _
    %v68 = vld [vmem:[#allocation3] sm:$0xff]
    %v69 = vld [vmem:[#allocation6] sm:$0xff]
    %v70 = vld [vmem:[#allocation6 + $0x8] sm:$0xff]
    %v71 = vld [vmem:[#allocation6 + $0x10] sm:$0xff]
    %v72 = vld [vmem:[#allocation6 + $0x18] sm:$0xff]
    %v73 = vld [vmem:[#allocation6 + $0x20] sm:$0xff]
    %v74 = vld [vmem:[#allocation6 + $0x28] sm:$0xff]
    %v75 = vld [vmem:[#allocation6 + $0x30] sm:$0xff]
    %v76 = vld [vmem:[#allocation6 + $0x38] sm:$0xff]
    %v77 = vld [vmem:[#allocation6 + $0x40] sm:$0xff]
    %v78 = vld [vmem:[#allocation6 + $0x48] sm:$0xff]
    %v79 = vld [vmem:[#allocation6 + $0x50] sm:$0xff]
    %v80 = vld [vmem:[#allocation6 + $0x58] sm:$0xff]
    %v81 = vld [vmem:[#allocation6 + $0x60] sm:$0xf]
    %v82 = vld [vmem:[#allocation6 + $0x68] sm:$0xf]
    %v83 = vld [vmem:[%s2] sm:$0x3]
    %v85 = vlaneseq
    %v86 = vshrl.u32 %v85, 7
    %v87 = vsub.s32 0, %v86
    %v88 = vrot.slane %v83, %v87
    %v89 = vlaneseq
    %v90 = vshrl.u32 %v89, 7
    %v91 = vsub.s32 1, %v90
    %v92 = vrot.slane %v83, %v91
    %vm95 = vcmask 424960
    %v97 = vsel %vm95, %v68, 0
    %vm99 = vcmask 1043456
    %v101 = vsel %vm99, %v81, 0
    %v104 = vsel %vm99, %v82, 0
    %106 = vmatprep.subr.mxu0 %v70
    %107 = vmatpush1.msra.mxu0 %v69
    %108 = vmatprep.subr.mxu0 %v72
    %109 = vmatpush1.msra.mxu0 %v71
    %110 = vmatprep.subr.mxu0 %v74
    %111 = vmatpush1.msra.mxu0 %v73
    %112 = vmatprep.subr.mxu0 %v76
    %113 = vmatpush1.msra.mxu0 %v75
    %114 = vmatprep.subr.mxu0 %v78
    %115 = vmatpush1.msra.mxu0 %v77
    %116 = vmatprep.subr.mxu0 %v80
    %117 = vmatpush1.msra.mxu0 %v79
    %118 = vmatprep.subr.mxu0 %v104
    %119 = vmatpush1.msra.mxu0 %v101
    %120 = vmatprep.subr.mxu0 0.0
    %121 = vmatpush1.msra.mxu0 0.0
    %122 = vmatprep.subr.mxu0 0.0
    %123 = vmatpush1.msra.mxu0 0.0
    %124 = vmatprep.subr.mxu0 0.0
    %125 = vmatpush1.msra.mxu0 0.0
    %126 = vmatprep.subr.mxu0 0.0
    %127 = vmatpush1.msra.mxu0 0.0
    %128 = vmatprep.subr.mxu0 0.0
    %129 = vmatpush1.msra.mxu0 0.0
    %130 = vmatprep.subr.mxu0 0.0
    %131 = vmatpush1.msra.mxu0 0.0
    %132 = vmatprep.subr.mxu0 0.0
    %133 = vmatpush1.msra.mxu0 0.0
    %134 = vmatprep.subr.mxu0 0.0
    %135 = vmatpush1.msra.mxu0 0.0
    %136 = vmatprep.subr.mxu0 0.0
    %137 = vmatpush1.msra.mxu0 0.0
    %138 = vmatprep.subr.mxu0 0.0
    %139 = vmatpush1.msra.mxu0 0.0
    %140 = vmatprep.subr.mxu0 0.0
    %141 = vmatpush1.msra.mxu0 0.0
    %142 = vmatprep.subr.mxu0 0.0
    %143 = vmatpush1.msra.mxu0 0.0
    %144 = vmatprep.subr.mxu0 0.0
    %145 = vmatpush1.msra.mxu0 0.0
    %146 = vmatprep.subr.mxu0 0.0
    %147 = vmatpush1.msra.mxu0 0.0
    %148 = vmatprep.subr.mxu0 0.0
    %149 = vmatpush1.msra.mxu0 0.0
    %150 = vmatprep.subr.mxu0 0.0
    %151 = vmatpush1.msra.mxu0 0.0
    %152 = vmatprep.subr.mxu0 0.0
    %153 = vmatpush1.msra.mxu0 0.0
    %154 = vmatprep.subr.mxu0 0.0
    %155 = vmatpush1.msra.mxu0 0.0
    %156 = vmatprep.subr.mxu0 0.0
    %157 = vmatpush1.msra.mxu0 0.0
    %158 = vmatprep.subr.mxu0 0.0
    %159 = vmatpush1.msra.mxu0 0.0
    %160 = vmatprep.subr.mxu0 0.0
    %161 = vmatpush1.msra.mxu0 0.0
    %162 = vmatprep.subr.mxu0 0.0
    %163 = vmatpush1.msra.mxu0 0.0
    %164 = vmatprep.subr.mxu0 0.0
    %165 = vmatpush1.msra.mxu0 0.0
    %166 = vmatprep.subr.mxu0 0.0
    %167 = vmatpush1.msra.mxu0 0.0
    %168 = vmatprep.subr.mxu0 0.0
    %169 = vmatpush1.msra.mxu0 0.0
    %170 = vmatprep.mubr.f32.mxu0 0.0
    %171 = vmatmul.mubr.f32.gmra.mrb[0].mxu0 %v97
    %v172 = vpop.f32.mrb[0].mxu0
    %v173 = vadd.f32 %v88, %v172
    %v174 = vpop.f32.mrb[0].mxu0
    %v175 = vadd.f32 %v92, %v174
    %176 = vdwg.mxu0
    %v177 = vmax.f32 %v173, 0.0
    %v178 = vmax.f32 %v175, 0.0
    %v179 = vld [vmem:[#allocation8] sm:$0xff]
    %v180 = vld [vmem:[#allocation8 + $0x8] sm:$0xff]
    %v181 = vld [vmem:[#allocation8 + $0x10] sm:$0xff]
    %v182 = vld [vmem:[#allocation8 + $0x18] sm:$0xff]
    %v183 = vld [vmem:[#allocation8 + $0x20] sm:$0xff]
    %v184 = vld [vmem:[#allocation8 + $0x28] sm:$0xff]
    %v185 = vld [vmem:[#allocation8 + $0x30] sm:$0xff]
    %v186 = vld [vmem:[#allocation8 + $0x38] sm:$0xff]
    %v187 = vld [vmem:[#allocation8 + $0x40] sm:$0xff]
    %v188 = vld [vmem:[#allocation8 + $0x48] sm:$0xff]
    %v189 = vld [vmem:[#allocation8 + $0x50] sm:$0xff]
    %v190 = vld [vmem:[#allocation8 + $0x58] sm:$0xff]
    %v191 = vld [vmem:[#allocation8 + $0x60] sm:$0xff]
    %v192 = vld [vmem:[#allocation8 + $0x68] sm:$0xff]
    %v193 = vld [vmem:[#allocation8 + $0x70] sm:$0xff]
    %v194 = vld [vmem:[#allocation8 + $0x78] sm:$0xff]
    %v195 = vld [vmem:[#allocation8 + $0x80] sm:$0xff]
    %v196 = vld [vmem:[#allocation8 + $0x88] sm:$0xff]
    %v197 = vld [vmem:[#allocation8 + $0x90] sm:$0xff]
    %v198 = vld [vmem:[#allocation8 + $0x98] sm:$0xff]
    %v199 = vld [vmem:[#allocation8 + $0xa0] sm:$0xff]
    %v200 = vld [vmem:[#allocation8 + $0xa8] sm:$0xff]
    %v201 = vld [vmem:[#allocation8 + $0xb0] sm:$0xff]
    %v202 = vld [vmem:[#allocation8 + $0xb8] sm:$0xff]
    %v203 = vld [vmem:[#allocation8 + $0xc0] sm:$0xff]
    %v204 = vld [vmem:[#allocation8 + $0xc8] sm:$0xff]
    %v205 = vld [vmem:[#allocation8 + $0xd0] sm:$0xff]
    %v206 = vld [vmem:[#allocation8 + $0xd8] sm:$0xff]
    %v207 = vld [vmem:[#allocation8 + $0xe0] sm:$0xff]
    %v208 = vld [vmem:[#allocation8 + $0xe8] sm:$0xff]
    %v209 = vld [vmem:[#allocation8 + $0xf0] sm:$0xff]
    %v210 = vld [vmem:[#allocation8 + $0xf8] sm:$0xff]
    %v211 = vld [vmem:[%s4] sm:$0x1]
    %v213 = vlaneseq
    %v214 = vshrl.u32 %v213, 7
    %v215 = vsub.s32 0, %v214
    %v216 = vrot.slane %v211, %v215
    %218 = vmatprep.subr.mxu0 0.0
    %219 = vmatpush1.msra.mxu0 %v179
    %220 = vmatprep.subr.mxu0 0.0
    %221 = vmatpush1.msra.mxu0 %v180
    %222 = vmatprep.subr.mxu0 0.0
    %223 = vmatpush1.msra.mxu0 %v181
    %224 = vmatprep.subr.mxu0 0.0
    %225 = vmatpush1.msra.mxu0 %v182
    %226 = vmatprep.subr.mxu0 0.0
    %227 = vmatpush1.msra.mxu0 %v183
    %228 = vmatprep.subr.mxu0 0.0
    %229 = vmatpush1.msra.mxu0 %v184
    %230 = vmatprep.subr.mxu0 0.0
    %231 = vmatpush1.msra.mxu0 %v185
    %232 = vmatprep.subr.mxu0 0.0
    %233 = vmatpush1.msra.mxu0 %v186
    %234 = vmatprep.subr.mxu0 0.0
    %235 = vmatpush1.msra.mxu0 %v187
    %236 = vmatprep.subr.mxu0 0.0
    %237 = vmatpush1.msra.mxu0 %v188
    %238 = vmatprep.subr.mxu0 0.0
    %239 = vmatpush1.msra.mxu0 %v189
    %240 = vmatprep.subr.mxu0 0.0
    %241 = vmatpush1.msra.mxu0 %v190
    %242 = vmatprep.subr.mxu0 0.0
    %243 = vmatpush1.msra.mxu0 %v191
    %244 = vmatprep.subr.mxu0 0.0
    %245 = vmatpush1.msra.mxu0 %v192
    %246 = vmatprep.subr.mxu0 0.0
    %247 = vmatpush1.msra.mxu0 %v193
    %248 = vmatprep.subr.mxu0 0.0
    %249 = vmatpush1.msra.mxu0 %v194
    %250 = vmatprep.subr.mxu0 0.0
    %251 = vmatpush1.msra.mxu0 %v195
    %252 = vmatprep.subr.mxu0 0.0
    %253 = vmatpush1.msra.mxu0 %v196
    %254 = vmatprep.subr.mxu0 0.0
    %255 = vmatpush1.msra.mxu0 %v197
    %256 = vmatprep.subr.mxu0 0.0
    %257 = vmatpush1.msra.mxu0 %v198
    %258 = vmatprep.subr.mxu0 0.0
    %259 = vmatpush1.msra.mxu0 %v199
    %260 = vmatprep.subr.mxu0 0.0
    %261 = vmatpush1.msra.mxu0 %v200
    %262 = vmatprep.subr.mxu0 0.0
    %263 = vmatpush1.msra.mxu0 %v201
    %264 = vmatprep.subr.mxu0 0.0
    %265 = vmatpush1.msra.mxu0 %v202
    %266 = vmatprep.subr.mxu0 0.0
    %267 = vmatpush1.msra.mxu0 %v203
    %268 = vmatprep.subr.mxu0 0.0
    %269 = vmatpush1.msra.mxu0 %v204
    %270 = vmatprep.subr.mxu0 0.0
    %271 = vmatpush1.msra.mxu0 %v205
    %272 = vmatprep.subr.mxu0 0.0
    %273 = vmatpush1.msra.mxu0 %v206
    %274 = vmatprep.subr.mxu0 0.0
    %275 = vmatpush1.msra.mxu0 %v207
    %276 = vmatprep.subr.mxu0 0.0
    %277 = vmatpush1.msra.mxu0 %v208
    %278 = vmatprep.subr.mxu0 0.0
    %279 = vmatpush1.msra.mxu0 %v209
    %280 = vmatprep.subr.mxu0 0.0
    %281 = vmatpush1.msra.mxu0 %v210
    %282 = vmatprep.mubr.f32.mxu0 %v178
    %283 = vmatmul.mubr.f32.gmra.mrb[0].mxu0 %v177
    %v284 = vpop.f32.mrb[0].mxu0
    %v285 = vadd.f32 %v216, %v284
    %v286 = vpop.f32.mrb[0].mxu0
    %287 = vdwg.mxu0
    %v288 = vmax.f32 %v285, 0.0
    %v289 = vld [vmem:[%s5] sm:$0x1]
    %v290 = vld [vmem:[#allocation2] sm:$0x1]
    %292 = vset.pattern.permute.xlu0 0
    %293 = vperm.xlu0 %292, %v290
    %v294 = vpop.permute.xlu0 %293
    %v296 = vlaneseq
    %v297 = vshrl.u32 %v296, 7
    %v298 = vsub.s32 0, %v297
    %v299 = vrot.slane %v294, %v298
    %300 = vmatprep.subr.mxu0 0.0
    %301 = vmatpush1.xpose.msra.mxu0 %v288
    %302 = vmatprep.subr.mxu0 0.0
    %303 = vmatpush1.xpose.msra.mxu0 0.0
    %304 = vmatprep.subr.mxu0 0.0
    %305 = vmatpush1.xpose.msra.mxu0 0.0
    %306 = vmatprep.subr.mxu0 0.0
    %307 = vmatpush1.xpose.msra.mxu0 0.0
    %308 = vmatprep.subr.mxu0 0.0
    %309 = vmatpush1.xpose.msra.mxu0 0.0
    %310 = vmatprep.subr.mxu0 0.0
    %311 = vmatpush1.xpose.msra.mxu0 0.0
    %312 = vmatprep.subr.mxu0 0.0
    %313 = vmatpush1.xpose.msra.mxu0 0.0
    %314 = vmatprep.subr.mxu0 0.0
    %315 = vmatpush1.xpose.msra.mxu0 0.0
    %316 = vmatprep.subr.mxu0 0.0
    %317 = vmatpush1.xpose.msra.mxu0 0.0
    %318 = vmatprep.subr.mxu0 0.0
    %319 = vmatpush1.xpose.msra.mxu0 0.0
    %320 = vmatprep.subr.mxu0 0.0
    %321 = vmatpush1.xpose.msra.mxu0 0.0
    %322 = vmatprep.subr.mxu0 0.0
    %323 = vmatpush1.xpose.msra.mxu0 0.0
    %324 = vmatprep.subr.mxu0 0.0
    %325 = vmatpush1.xpose.msra.mxu0 0.0
    %326 = vmatprep.subr.mxu0 0.0
    %327 = vmatpush1.xpose.msra.mxu0 0.0
    %328 = vmatprep.subr.mxu0 0.0
    %329 = vmatpush1.xpose.msra.mxu0 0.0
    %330 = vmatprep.subr.mxu0 0.0
    %331 = vmatpush1.xpose.msra.mxu0 0.0
    %332 = vmatprep.subr.mxu0 0.0
    %333 = vmatpush1.xpose.msra.mxu0 0.0
    %334 = vmatprep.subr.mxu0 0.0
    %335 = vmatpush1.xpose.msra.mxu0 0.0
    %336 = vmatprep.subr.mxu0 0.0
    %337 = vmatpush1.xpose.msra.mxu0 0.0
    %338 = vmatprep.subr.mxu0 0.0
    %339 = vmatpush1.xpose.msra.mxu0 0.0
    %340 = vmatprep.subr.mxu0 0.0
    %341 = vmatpush1.xpose.msra.mxu0 0.0
    %342 = vmatprep.subr.mxu0 0.0
    %343 = vmatpush1.xpose.msra.mxu0 0.0
    %344 = vmatprep.subr.mxu0 0.0
    %345 = vmatpush1.xpose.msra.mxu0 0.0
    %346 = vmatprep.subr.mxu0 0.0
    %347 = vmatpush1.xpose.msra.mxu0 0.0
    %348 = vmatprep.subr.mxu0 0.0
    %349 = vmatpush1.xpose.msra.mxu0 0.0
    %350 = vmatprep.subr.mxu0 0.0
    %351 = vmatpush1.xpose.msra.mxu0 0.0
    %352 = vmatprep.subr.mxu0 0.0
    %353 = vmatpush1.xpose.msra.mxu0 0.0
    %354 = vmatprep.subr.mxu0 0.0
    %355 = vmatpush1.xpose.msra.mxu0 0.0
    %356 = vmatprep.subr.mxu0 0.0
    %357 = vmatpush1.xpose.msra.mxu0 0.0
    %358 = vmatprep.subr.mxu0 0.0
    %359 = vmatpush1.xpose.msra.mxu0 0.0
    %360 = vmatprep.subr.mxu0 0.0
    %361 = vmatpush1.xpose.msra.mxu0 0.0
    %362 = vmatprep.subr.mxu0 0.0
    %363 = vmatpush1.xpose.msra.mxu0 0.0
    %364 = vmatprep.mubr.f32.mxu0 0.0
    %365 = vmatmul.mubr.f32.gmra.mrb[0].mxu0 %v289
    %v366 = vpop.f32.mrb[0].mxu0
    %v367 = vadd.f32 %v299, %v366
    %v368 = vpop.f32.mrb[0].mxu0
    %369 = vdwg.mxu0
    %v370 = vlaneseq
    %v371 = vshrl.u32 %v370, 7
    %v372 = vsub.s32 0, %v371
    %v373 = vrot.slane %v367, %v372
    %vm374 = vcmask 64512
    %375 = vst.msk [vmem:[#allocation9] sm:$0xff] %vm374, %v373
    // Predicated region
    $region42: #{tpu_custom_call.1} parent=1 // pred_check
      _
    $region43: #{tpu_custom_call.1} parent=1 // pred_check_branch
      %377 = sbr.rel (0) target = $region45
    $region44: #{tpu_custom_call.1} parent=1 // pred_region
      %s379 = ssub.s32 128, 128
      %380 = vsyncadd [#allocation5], %s379
      %s382 = sshll.u32 [#allocation9], 4
      %s383 = int_to_ptr.vmem [resolvable:$true] %s382
      %385 = dma.vmem_to_hbm [thread:$0]  %s383, 128, %s7, [#allocation5]
    $region45: #{tpu_custom_call.1} parent=1 // pred_fallthru
      _
    // Predicated region
    $region46: #{tpu_custom_call.1} parent=1 // pred_check
      _
    $region47: #{tpu_custom_call.1} parent=1 // pred_check_branch
      %387 = sbr.rel (0) target = $region49
    $region48: #{tpu_custom_call.1} parent=1 // pred_region
      %388 = dma.done [#allocation5], 128
    $region49: #{tpu_custom_call.1} parent=1 // pred_fallthru
      _
    %389 = vsyncpa [#allocation4], 1
    %390 = vsyncpa [#allocation7], 1
    %391 = vsyncpa [#allocation5], 1

</llo_original>
